<compile_context>
chip_gen: v5e
topology: v5e:2x2
jax: 0.10.0
libtpu: 0.0.40
codegen_flags: <defaults>
</compile_context>

<pallas_src>
import functools

import jax
import jax.numpy as jnp
from jax.experimental import pallas as pl
from jax.experimental.pallas import tpu as pltpu


def _round_up(n, m):
    return ((n + m - 1) // m) * m


def dqn_kernel(x_ref, w1_ref, b1_ref, w2_ref, b2_ref, w3_ref, b3_ref, o_ref):
    """One batch tile, native layout (batch on sublanes, features on lanes).

    x_ref : (TB, S)   float32
    wK_ref: (K, N)    float32   (torch W transposed, so y = x @ wK + bK)
    bK_ref: (1, N)    float32
    o_ref : (TB, A)   float32
    """

    def dense(h, wt_ref, b_ref):
        # Unrolled VPU broadcast-FMA: exact f32, avoids a K<=16 MXU matmul.
        wt = wt_ref[...]                        # (K, N)
        b = b_ref[...]                          # (1, N)
        acc = b + h[:, 0:1] * wt[0:1, :]        # (TB, N) f32
        for k in range(1, wt.shape[0]):         # K in {4, 16, 8} -> fully unrolled
            acc = acc + h[:, k:k + 1] * wt[k:k + 1, :]
        return acc

    h = jnp.maximum(dense(x_ref[...], w1_ref, b1_ref), 0.0)   # (TB, 16)
    h = jnp.maximum(dense(h, w2_ref, b2_ref), 0.0)            # (TB, 8)
    o_ref[...] = dense(h, w3_ref, b3_ref)                     # (TB, A), no activation


@functools.partial(jax.jit, static_argnames=("batch_tile",))
def dqn_forward(x, params, *, batch_tile=4096):
    """x: (B, state_size).  params: torch-native {'W1': (16, S), 'b1': (16,), ...}.

    Returns (B, action_size) float32 with the same semantics as DQNetwork.forward.
    """
    B, S = x.shape
    A = params["W3"].shape[0]
    x = x.astype(jnp.float32)   # no-op for f32 inputs

    # Batch tile: a multiple of 8 (sublane width).  Single grid step whenever the
    # whole batch fits one tile; Pallas masks the out-of-bounds tail of the last
    # tile when the grid does not divide B.
    tb = min(_round_up(max(B, 8), 8), _round_up(batch_tile, 8))
    grid = pl.cdiv(B, tb)

    # Tiny per-layer constants (<= 128 floats each): torch [out, in] -> [in, out],
    # biases as (1, out) rows.  Negligible next to the x / output HBM traffic.
    def wt(name):
        return params[name].astype(jnp.float32).T

    def bias(name):
        return params[name].astype(jnp.float32).reshape(1, -1)

    w1t, b1 = wt("W1"), bias("b1")     # (S, 16), (1, 16)
    w2t, b2 = wt("W2"), bias("b2")     # (16, 8), (1, 8)
    w3t, b3 = wt("W3"), bias("b3")     # (8, A),  (1, A)

    replicated = lambda a: pl.BlockSpec(a.shape, lambda i: (0, 0))

    # VMEM budget: lane-padded (tb, <=16) f32 blocks cost ~512 B/row each; x and
    # the output are double-buffered plus ~3 row-sized intermediates -> ~3.5 KiB
    # per tile row.  Set the scoped limit explicitly (v5e default is only 16 MiB);
    # capped at 64 MiB for v7x's smaller physical VMEM.
    vmem_limit = int(min(64 * 1024 * 1024, max(32 * 1024 * 1024, 4 * tb * 1024)))

    return pl.pallas_call(
        dqn_kernel,
        out_shape=jax.ShapeDtypeStruct((B, A), jnp.float32),
        grid=(grid,),
        in_specs=[
            pl.BlockSpec((tb, S), lambda i: (i, 0)),    # x tile, native layout
            replicated(w1t), replicated(b1),
            replicated(w2t), replicated(b2),
            replicated(w3t), replicated(b3),
        ],
        out_specs=pl.BlockSpec((tb, A), lambda i: (i, 0)),
        compiler_params=pltpu.CompilerParams(
            # Batch tiles are independent.
            dimension_semantics=("parallel",),
            vmem_limit_bytes=vmem_limit,
        ),
    )(x, w1t, b1, w2t, b2, w3t, b3)


def init_params(key, state_size, action_size):
    """Torch-native layout, matching nn.Linear's uniform(-1/sqrt(fan_in), +)."""
    dims = [(state_size, 16), (16, 8), (8, action_size)]
    params = {}
    for i, (fan_in, fan_out) in enumerate(dims, start=1):
        key, kw, kb = jax.random.split(key, 3)
        bound = float(fan_in) ** -0.5
        params[f"W{i}"] = jax.random.uniform(
            kw, (fan_out, fan_in), jnp.float32, -bound, bound)
        params[f"b{i}"] = jax.random.uniform(
            kb, (fan_out,), jnp.float32, -bound, bound)
    return params


def dqn_reference(x, params):
    """Pure-JAX f32 reference (precision=HIGHEST so the XLA matmuls are
    f32-accurate, matching the kernel's exact f32 VPU math)."""
    hp = jax.lax.Precision.HIGHEST
    h1 = jnp.maximum(jnp.dot(x, params["W1"].T, precision=hp) + params["b1"], 0.0)
    h2 = jnp.maximum(jnp.dot(h1, params["W2"].T, precision=hp) + params["b2"], 0.0)
    return jnp.dot(h2, params["W3"].T, precision=hp) + params["b3"]


if __name__ == "__main__":
    # CartPole-v1: state_size = 4, action_size = 2.
    state_size, action_size = 4, 2

    key = jax.random.PRNGKey(0)
    key, k_params = jax.random.split(key)
    params = init_params(k_params, state_size, action_size)

    cases = [
        (8, {}),                        # tiny batch, single grid step
        (13, {}),                       # non-multiple-of-8 batch -> masked tile tail
        (1000, {}),                     # typical replay-buffer batch, single tile
        (1000, {"batch_tile": 256}),    # force the multi-step pipelined grid path
    ]
    for batch, kwargs in cases:
        key, kx = jax.random.split(key)
        x = jax.random.normal(kx, (batch, state_size), jnp.float32)

        out = jax.block_until_ready(dqn_forward(x, params, **kwargs))
        assert out.shape == (batch, action_size), out.shape
        assert out.dtype == jnp.float32, out.dtype

        ref = dqn_reference(x, params)
        assert jnp.allclose(out, ref, atol=1e-3, rtol=1e-3), (
            f"mismatch vs reference (batch={batch}, kwargs={kwargs}): "
            f"max abs err {jnp.max(jnp.abs(out - ref))}")

    print("KERNEL_OK")
</pallas_src>

<mosaic_0001>
module attributes {stable_mosaic.version = 11 : i64} {
  func.func @dqn_kernel(%arg0: i32, %arg1: memref<8x4xf32, #tpu.memory_space<vmem>>, %arg2: memref<4x16xf32, #tpu.memory_space<vmem>>, %arg3: memref<1x16xf32, #tpu.memory_space<vmem>>, %arg4: memref<16x8xf32, #tpu.memory_space<vmem>>, %arg5: memref<1x8xf32, #tpu.memory_space<vmem>>, %arg6: memref<8x2xf32, #tpu.memory_space<vmem>>, %arg7: memref<1x2xf32, #tpu.memory_space<vmem>>, %arg8: memref<8x2xf32, #tpu.memory_space<vmem>>) attributes {dimension_semantics = [#tpu.dimension_semantics<parallel>], iteration_bounds = array<i64: 1>, scalar_prefetch = 0 : i64, scratch_operands = 0 : i64, tpu.core_type = #tpu.core_type<tc>, window_params = [{transform_indices = @transform_0, window_bounds = array<i64: 8, 4>}, {pipeline_mode = #tpu.pipeline_mode<synchronous>, transform_indices = @transform_1, window_bounds = array<i64: 4, 16>}, {pipeline_mode = #tpu.pipeline_mode<synchronous>, transform_indices = @transform_2, window_bounds = array<i64: 1, 16>}, {pipeline_mode = #tpu.pipeline_mode<synchronous>, transform_indices = @transform_3, window_bounds = array<i64: 16, 8>}, {pipeline_mode = #tpu.pipeline_mode<synchronous>, transform_indices = @transform_4, window_bounds = array<i64: 1, 8>}, {pipeline_mode = #tpu.pipeline_mode<synchronous>, transform_indices = @transform_5, window_bounds = array<i64: 8, 2>}, {pipeline_mode = #tpu.pipeline_mode<synchronous>, transform_indices = @transform_6, window_bounds = array<i64: 1, 2>}, {transform_indices = @transform_7, window_bounds = array<i64: 8, 2>}]} {
    %c0 = arith.constant 0 : index
    %c0_0 = arith.constant 0 : index
    %0 = vector.load %arg1[%c0, %c0_0] : memref<8x4xf32, #tpu.memory_space<vmem>>, vector<8x4xf32>
    %c0_1 = arith.constant 0 : index
    %c0_2 = arith.constant 0 : index
    %1 = vector.load %arg2[%c0_1, %c0_2] : memref<4x16xf32, #tpu.memory_space<vmem>>, vector<4x16xf32>
    %c0_3 = arith.constant 0 : index
    %c0_4 = arith.constant 0 : index
    %2 = vector.load %arg3[%c0_3, %c0_4] : memref<1x16xf32, #tpu.memory_space<vmem>>, vector<1x16xf32>
    %3 = vector.extract_strided_slice %0 {offsets = [0, 0], sizes = [8, 1], strides = [1, 1]} : vector<8x4xf32> to vector<8x1xf32>
    %4 = vector.extract_strided_slice %1 {offsets = [0, 0], sizes = [1, 16], strides = [1, 1]} : vector<4x16xf32> to vector<1x16xf32>
    %5 = vector.broadcast %3 : vector<8x1xf32> to vector<8x16xf32>
    %6 = vector.broadcast %4 : vector<1x16xf32> to vector<8x16xf32>
    %7 = arith.mulf %5, %6 : vector<8x16xf32>
    %8 = vector.broadcast %2 : vector<1x16xf32> to vector<8x16xf32>
    %9 = arith.addf %8, %7 : vector<8x16xf32>
    %10 = vector.extract_strided_slice %0 {offsets = [0, 1], sizes = [8, 1], strides = [1, 1]} : vector<8x4xf32> to vector<8x1xf32>
    %11 = vector.extract_strided_slice %1 {offsets = [1, 0], sizes = [1, 16], strides = [1, 1]} : vector<4x16xf32> to vector<1x16xf32>
    %12 = vector.broadcast %10 : vector<8x1xf32> to vector<8x16xf32>
    %13 = vector.broadcast %11 : vector<1x16xf32> to vector<8x16xf32>
    %14 = arith.mulf %12, %13 : vector<8x16xf32>
    %15 = arith.addf %9, %14 : vector<8x16xf32>
    %16 = vector.extract_strided_slice %0 {offsets = [0, 2], sizes = [8, 1], strides = [1, 1]} : vector<8x4xf32> to vector<8x1xf32>
    %17 = vector.extract_strided_slice %1 {offsets = [2, 0], sizes = [1, 16], strides = [1, 1]} : vector<4x16xf32> to vector<1x16xf32>
    %18 = vector.broadcast %16 : vector<8x1xf32> to vector<8x16xf32>
    %19 = vector.broadcast %17 : vector<1x16xf32> to vector<8x16xf32>
    %20 = arith.mulf %18, %19 : vector<8x16xf32>
    %21 = arith.addf %15, %20 : vector<8x16xf32>
    %22 = vector.extract_strided_slice %0 {offsets = [0, 3], sizes = [8, 1], strides = [1, 1]} : vector<8x4xf32> to vector<8x1xf32>
    %23 = vector.extract_strided_slice %1 {offsets = [3, 0], sizes = [1, 16], strides = [1, 1]} : vector<4x16xf32> to vector<1x16xf32>
    %24 = vector.broadcast %22 : vector<8x1xf32> to vector<8x16xf32>
    %25 = vector.broadcast %23 : vector<1x16xf32> to vector<8x16xf32>
    %26 = arith.mulf %24, %25 : vector<8x16xf32>
    %27 = arith.addf %21, %26 : vector<8x16xf32>
    %cst = arith.constant 0.000000e+00 : f32
    %28 = vector.broadcast %cst : f32 to vector<8x16xf32>
    %29 = arith.maximumf %27, %28 : vector<8x16xf32>
    %c0_5 = arith.constant 0 : index
    %c0_6 = arith.constant 0 : index
    %30 = vector.load %arg4[%c0_5, %c0_6] : memref<16x8xf32, #tpu.memory_space<vmem>>, vector<16x8xf32>
    %c0_7 = arith.constant 0 : index
    %c0_8 = arith.constant 0 : index
    %31 = vector.load %arg5[%c0_7, %c0_8] : memref<1x8xf32, #tpu.memory_space<vmem>>, vector<1x8xf32>
    %32 = vector.extract_strided_slice %29 {offsets = [0, 0], sizes = [8, 1], strides = [1, 1]} : vector<8x16xf32> to vector<8x1xf32>
    %33 = vector.extract_strided_slice %30 {offsets = [0, 0], sizes = [1, 8], strides = [1, 1]} : vector<16x8xf32> to vector<1x8xf32>
    %34 = vector.broadcast %32 : vector<8x1xf32> to vector<8x8xf32>
    %35 = vector.broadcast %33 : vector<1x8xf32> to vector<8x8xf32>
    %36 = arith.mulf %34, %35 : vector<8x8xf32>
    %37 = vector.broadcast %31 : vector<1x8xf32> to vector<8x8xf32>
    %38 = arith.addf %37, %36 : vector<8x8xf32>
    %39 = vector.extract_strided_slice %29 {offsets = [0, 1], sizes = [8, 1], strides = [1, 1]} : vector<8x16xf32> to vector<8x1xf32>
    %40 = vector.extract_strided_slice %30 {offsets = [1, 0], sizes = [1, 8], strides = [1, 1]} : vector<16x8xf32> to vector<1x8xf32>
    %41 = vector.broadcast %39 : vector<8x1xf32> to vector<8x8xf32>
    %42 = vector.broadcast %40 : vector<1x8xf32> to vector<8x8xf32>
    %43 = arith.mulf %41, %42 : vector<8x8xf32>
    %44 = arith.addf %38, %43 : vector<8x8xf32>
    %45 = vector.extract_strided_slice %29 {offsets = [0, 2], sizes = [8, 1], strides = [1, 1]} : vector<8x16xf32> to vector<8x1xf32>
    %46 = vector.extract_strided_slice %30 {offsets = [2, 0], sizes = [1, 8], strides = [1, 1]} : vector<16x8xf32> to vector<1x8xf32>
    %47 = vector.broadcast %45 : vector<8x1xf32> to vector<8x8xf32>
    %48 = vector.broadcast %46 : vector<1x8xf32> to vector<8x8xf32>
    %49 = arith.mulf %47, %48 : vector<8x8xf32>
    %50 = arith.addf %44, %49 : vector<8x8xf32>
    %51 = vector.extract_strided_slice %29 {offsets = [0, 3], sizes = [8, 1], strides = [1, 1]} : vector<8x16xf32> to vector<8x1xf32>
    %52 = vector.extract_strided_slice %30 {offsets = [3, 0], sizes = [1, 8], strides = [1, 1]} : vector<16x8xf32> to vector<1x8xf32>
    %53 = vector.broadcast %51 : vector<8x1xf32> to vector<8x8xf32>
    %54 = vector.broadcast %52 : vector<1x8xf32> to vector<8x8xf32>
    %55 = arith.mulf %53, %54 : vector<8x8xf32>
    %56 = arith.addf %50, %55 : vector<8x8xf32>
    %57 = vector.extract_strided_slice %29 {offsets = [0, 4], sizes = [8, 1], strides = [1, 1]} : vector<8x16xf32> to vector<8x1xf32>
    %58 = vector.extract_strided_slice %30 {offsets = [4, 0], sizes = [1, 8], strides = [1, 1]} : vector<16x8xf32> to vector<1x8xf32>
    %59 = vector.broadcast %57 : vector<8x1xf32> to vector<8x8xf32>
    %60 = vector.broadcast %58 : vector<1x8xf32> to vector<8x8xf32>
    %61 = arith.mulf %59, %60 : vector<8x8xf32>
    %62 = arith.addf %56, %61 : vector<8x8xf32>
    %63 = vector.extract_strided_slice %29 {offsets = [0, 5], sizes = [8, 1], strides = [1, 1]} : vector<8x16xf32> to vector<8x1xf32>
    %64 = vector.extract_strided_slice %30 {offsets = [5, 0], sizes = [1, 8], strides = [1, 1]} : vector<16x8xf32> to vector<1x8xf32>
    %65 = vector.broadcast %63 : vector<8x1xf32> to vector<8x8xf32>
    %66 = vector.broadcast %64 : vector<1x8xf32> to vector<8x8xf32>
    %67 = arith.mulf %65, %66 : vector<8x8xf32>
    %68 = arith.addf %62, %67 : vector<8x8xf32>
    %69 = vector.extract_strided_slice %29 {offsets = [0, 6], sizes = [8, 1], strides = [1, 1]} : vector<8x16xf32> to vector<8x1xf32>
    %70 = vector.extract_strided_slice %30 {offsets = [6, 0], sizes = [1, 8], strides = [1, 1]} : vector<16x8xf32> to vector<1x8xf32>
    %71 = vector.broadcast %69 : vector<8x1xf32> to vector<8x8xf32>
    %72 = vector.broadcast %70 : vector<1x8xf32> to vector<8x8xf32>
    %73 = arith.mulf %71, %72 : vector<8x8xf32>
    %74 = arith.addf %68, %73 : vector<8x8xf32>
    %75 = vector.extract_strided_slice %29 {offsets = [0, 7], sizes = [8, 1], strides = [1, 1]} : vector<8x16xf32> to vector<8x1xf32>
    %76 = vector.extract_strided_slice %30 {offsets = [7, 0], sizes = [1, 8], strides = [1, 1]} : vector<16x8xf32> to vector<1x8xf32>
    %77 = vector.broadcast %75 : vector<8x1xf32> to vector<8x8xf32>
    %78 = vector.broadcast %76 : vector<1x8xf32> to vector<8x8xf32>
    %79 = arith.mulf %77, %78 : vector<8x8xf32>
    %80 = arith.addf %74, %79 : vector<8x8xf32>
    %81 = vector.extract_strided_slice %29 {offsets = [0, 8], sizes = [8, 1], strides = [1, 1]} : vector<8x16xf32> to vector<8x1xf32>
    %82 = vector.extract_strided_slice %30 {offsets = [8, 0], sizes = [1, 8], strides = [1, 1]} : vector<16x8xf32> to vector<1x8xf32>
    %83 = vector.broadcast %81 : vector<8x1xf32> to vector<8x8xf32>
    %84 = vector.broadcast %82 : vector<1x8xf32> to vector<8x8xf32>
    %85 = arith.mulf %83, %84 : vector<8x8xf32>
    %86 = arith.addf %80, %85 : vector<8x8xf32>
    %87 = vector.extract_strided_slice %29 {offsets = [0, 9], sizes = [8, 1], strides = [1, 1]} : vector<8x16xf32> to vector<8x1xf32>
    %88 = vector.extract_strided_slice %30 {offsets = [9, 0], sizes = [1, 8], strides = [1, 1]} : vector<16x8xf32> to vector<1x8xf32>
    %89 = vector.broadcast %87 : vector<8x1xf32> to vector<8x8xf32>
    %90 = vector.broadcast %88 : vector<1x8xf32> to vector<8x8xf32>
    %91 = arith.mulf %89, %90 : vector<8x8xf32>
    %92 = arith.addf %86, %91 : vector<8x8xf32>
    %93 = vector.extract_strided_slice %29 {offsets = [0, 10], sizes = [8, 1], strides = [1, 1]} : vector<8x16xf32> to vector<8x1xf32>
    %94 = vector.extract_strided_slice %30 {offsets = [10, 0], sizes = [1, 8], strides = [1, 1]} : vector<16x8xf32> to vector<1x8xf32>
    %95 = vector.broadcast %93 : vector<8x1xf32> to vector<8x8xf32>
    %96 = vector.broadcast %94 : vector<1x8xf32> to vector<8x8xf32>
    %97 = arith.mulf %95, %96 : vector<8x8xf32>
    %98 = arith.addf %92, %97 : vector<8x8xf32>
    %99 = vector.extract_strided_slice %29 {offsets = [0, 11], sizes = [8, 1], strides = [1, 1]} : vector<8x16xf32> to vector<8x1xf32>
    %100 = vector.extract_strided_slice %30 {offsets = [11, 0], sizes = [1, 8], strides = [1, 1]} : vector<16x8xf32> to vector<1x8xf32>
    %101 = vector.broadcast %99 : vector<8x1xf32> to vector<8x8xf32>
    %102 = vector.broadcast %100 : vector<1x8xf32> to vector<8x8xf32>
    %103 = arith.mulf %101, %102 : vector<8x8xf32>
    %104 = arith.addf %98, %103 : vector<8x8xf32>
    %105 = vector.extract_strided_slice %29 {offsets = [0, 12], sizes = [8, 1], strides = [1, 1]} : vector<8x16xf32> to vector<8x1xf32>
    %106 = vector.extract_strided_slice %30 {offsets = [12, 0], sizes = [1, 8], strides = [1, 1]} : vector<16x8xf32> to vector<1x8xf32>
    %107 = vector.broadcast %105 : vector<8x1xf32> to vector<8x8xf32>
    %108 = vector.broadcast %106 : vector<1x8xf32> to vector<8x8xf32>
    %109 = arith.mulf %107, %108 : vector<8x8xf32>
    %110 = arith.addf %104, %109 : vector<8x8xf32>
    %111 = vector.extract_strided_slice %29 {offsets = [0, 13], sizes = [8, 1], strides = [1, 1]} : vector<8x16xf32> to vector<8x1xf32>
    %112 = vector.extract_strided_slice %30 {offsets = [13, 0], sizes = [1, 8], strides = [1, 1]} : vector<16x8xf32> to vector<1x8xf32>
    %113 = vector.broadcast %111 : vector<8x1xf32> to vector<8x8xf32>
    %114 = vector.broadcast %112 : vector<1x8xf32> to vector<8x8xf32>
    %115 = arith.mulf %113, %114 : vector<8x8xf32>
    %116 = arith.addf %110, %115 : vector<8x8xf32>
    %117 = vector.extract_strided_slice %29 {offsets = [0, 14], sizes = [8, 1], strides = [1, 1]} : vector<8x16xf32> to vector<8x1xf32>
    %118 = vector.extract_strided_slice %30 {offsets = [14, 0], sizes = [1, 8], strides = [1, 1]} : vector<16x8xf32> to vector<1x8xf32>
    %119 = vector.broadcast %117 : vector<8x1xf32> to vector<8x8xf32>
    %120 = vector.broadcast %118 : vector<1x8xf32> to vector<8x8xf32>
    %121 = arith.mulf %119, %120 : vector<8x8xf32>
    %122 = arith.addf %116, %121 : vector<8x8xf32>
    %123 = vector.extract_strided_slice %29 {offsets = [0, 15], sizes = [8, 1], strides = [1, 1]} : vector<8x16xf32> to vector<8x1xf32>
    %124 = vector.extract_strided_slice %30 {offsets = [15, 0], sizes = [1, 8], strides = [1, 1]} : vector<16x8xf32> to vector<1x8xf32>
    %125 = vector.broadcast %123 : vector<8x1xf32> to vector<8x8xf32>
    %126 = vector.broadcast %124 : vector<1x8xf32> to vector<8x8xf32>
    %127 = arith.mulf %125, %126 : vector<8x8xf32>
    %128 = arith.addf %122, %127 : vector<8x8xf32>
    %cst_9 = arith.constant 0.000000e+00 : f32
    %129 = vector.broadcast %cst_9 : f32 to vector<8x8xf32>
    %130 = arith.maximumf %128, %129 : vector<8x8xf32>
    %c0_10 = arith.constant 0 : index
    %c0_11 = arith.constant 0 : index
    %131 = vector.load %arg6[%c0_10, %c0_11] : memref<8x2xf32, #tpu.memory_space<vmem>>, vector<8x2xf32>
    %c0_12 = arith.constant 0 : index
    %c0_13 = arith.constant 0 : index
    %132 = vector.load %arg7[%c0_12, %c0_13] : memref<1x2xf32, #tpu.memory_space<vmem>>, vector<1x2xf32>
    %133 = vector.extract_strided_slice %130 {offsets = [0, 0], sizes = [8, 1], strides = [1, 1]} : vector<8x8xf32> to vector<8x1xf32>
    %134 = vector.extract_strided_slice %131 {offsets = [0, 0], sizes = [1, 2], strides = [1, 1]} : vector<8x2xf32> to vector<1x2xf32>
    %135 = vector.broadcast %133 : vector<8x1xf32> to vector<8x2xf32>
    %136 = vector.broadcast %134 : vector<1x2xf32> to vector<8x2xf32>
    %137 = arith.mulf %135, %136 : vector<8x2xf32>
    %138 = vector.broadcast %132 : vector<1x2xf32> to vector<8x2xf32>
    %139 = arith.addf %138, %137 : vector<8x2xf32>
    %140 = vector.extract_strided_slice %130 {offsets = [0, 1], sizes = [8, 1], strides = [1, 1]} : vector<8x8xf32> to vector<8x1xf32>
    %141 = vector.extract_strided_slice %131 {offsets = [1, 0], sizes = [1, 2], strides = [1, 1]} : vector<8x2xf32> to vector<1x2xf32>
    %142 = vector.broadcast %140 : vector<8x1xf32> to vector<8x2xf32>
    %143 = vector.broadcast %141 : vector<1x2xf32> to vector<8x2xf32>
    %144 = arith.mulf %142, %143 : vector<8x2xf32>
    %145 = arith.addf %139, %144 : vector<8x2xf32>
    %146 = vector.extract_strided_slice %130 {offsets = [0, 2], sizes = [8, 1], strides = [1, 1]} : vector<8x8xf32> to vector<8x1xf32>
    %147 = vector.extract_strided_slice %131 {offsets = [2, 0], sizes = [1, 2], strides = [1, 1]} : vector<8x2xf32> to vector<1x2xf32>
    %148 = vector.broadcast %146 : vector<8x1xf32> to vector<8x2xf32>
    %149 = vector.broadcast %147 : vector<1x2xf32> to vector<8x2xf32>
    %150 = arith.mulf %148, %149 : vector<8x2xf32>
    %151 = arith.addf %145, %150 : vector<8x2xf32>
    %152 = vector.extract_strided_slice %130 {offsets = [0, 3], sizes = [8, 1], strides = [1, 1]} : vector<8x8xf32> to vector<8x1xf32>
    %153 = vector.extract_strided_slice %131 {offsets = [3, 0], sizes = [1, 2], strides = [1, 1]} : vector<8x2xf32> to vector<1x2xf32>
    %154 = vector.broadcast %152 : vector<8x1xf32> to vector<8x2xf32>
    %155 = vector.broadcast %153 : vector<1x2xf32> to vector<8x2xf32>
    %156 = arith.mulf %154, %155 : vector<8x2xf32>
    %157 = arith.addf %151, %156 : vector<8x2xf32>
    %158 = vector.extract_strided_slice %130 {offsets = [0, 4], sizes = [8, 1], strides = [1, 1]} : vector<8x8xf32> to vector<8x1xf32>
    %159 = vector.extract_strided_slice %131 {offsets = [4, 0], sizes = [1, 2], strides = [1, 1]} : vector<8x2xf32> to vector<1x2xf32>
    %160 = vector.broadcast %158 : vector<8x1xf32> to vector<8x2xf32>
    %161 = vector.broadcast %159 : vector<1x2xf32> to vector<8x2xf32>
    %162 = arith.mulf %160, %161 : vector<8x2xf32>
    %163 = arith.addf %157, %162 : vector<8x2xf32>
    %164 = vector.extract_strided_slice %130 {offsets = [0, 5], sizes = [8, 1], strides = [1, 1]} : vector<8x8xf32> to vector<8x1xf32>
    %165 = vector.extract_strided_slice %131 {offsets = [5, 0], sizes = [1, 2], strides = [1, 1]} : vector<8x2xf32> to vector<1x2xf32>
    %166 = vector.broadcast %164 : vector<8x1xf32> to vector<8x2xf32>
    %167 = vector.broadcast %165 : vector<1x2xf32> to vector<8x2xf32>
    %168 = arith.mulf %166, %167 : vector<8x2xf32>
    %169 = arith.addf %163, %168 : vector<8x2xf32>
    %170 = vector.extract_strided_slice %130 {offsets = [0, 6], sizes = [8, 1], strides = [1, 1]} : vector<8x8xf32> to vector<8x1xf32>
    %171 = vector.extract_strided_slice %131 {offsets = [6, 0], sizes = [1, 2], strides = [1, 1]} : vector<8x2xf32> to vector<1x2xf32>
    %172 = vector.broadcast %170 : vector<8x1xf32> to vector<8x2xf32>
    %173 = vector.broadcast %171 : vector<1x2xf32> to vector<8x2xf32>
    %174 = arith.mulf %172, %173 : vector<8x2xf32>
    %175 = arith.addf %169, %174 : vector<8x2xf32>
    %176 = vector.extract_strided_slice %130 {offsets = [0, 7], sizes = [8, 1], strides = [1, 1]} : vector<8x8xf32> to vector<8x1xf32>
    %177 = vector.extract_strided_slice %131 {offsets = [7, 0], sizes = [1, 2], strides = [1, 1]} : vector<8x2xf32> to vector<1x2xf32>
    %178 = vector.broadcast %176 : vector<8x1xf32> to vector<8x2xf32>
    %179 = vector.broadcast %177 : vector<1x2xf32> to vector<8x2xf32>
    %180 = arith.mulf %178, %179 : vector<8x2xf32>
    %181 = arith.addf %175, %180 : vector<8x2xf32>
    %c0_14 = arith.constant 0 : index
    %c0_15 = arith.constant 0 : index
    %182 = vector.load %arg8[%c0_14, %c0_15] : memref<8x2xf32, #tpu.memory_space<vmem>>, vector<8x2xf32>
    tpu.vector_store %arg8[%c0_14, %c0_15], %181 {strides = array<i32>} : memref<8x2xf32, #tpu.memory_space<vmem>>, vector<8x2xf32>,
    return
  }
  func.func @transform_0(%arg0: i32) -> (i32, i32) {
    %c0_i32 = arith.constant 0 : i32
    %c0_i32_0 = arith.constant 0 : i32
    return %arg0, %c0_i32 : i32, i32
  }
  func.func @transform_1(%arg0: i32) -> (i32, i32) {
    %c0_i32 = arith.constant 0 : i32
    %c0_i32_0 = arith.constant 0 : i32
    %c0_i32_1 = arith.constant 0 : i32
    return %c0_i32, %c0_i32_0 : i32, i32
  }
  func.func @transform_2(%arg0: i32) -> (i32, i32) {
    %c0_i32 = arith.constant 0 : i32
    %c0_i32_0 = arith.constant 0 : i32
    %c0_i32_1 = arith.constant 0 : i32
    return %c0_i32, %c0_i32_0 : i32, i32
  }
  func.func @transform_3(%arg0: i32) -> (i32, i32) {
    %c0_i32 = arith.constant 0 : i32
    %c0_i32_0 = arith.constant 0 : i32
    %c0_i32_1 = arith.constant 0 : i32
    return %c0_i32, %c0_i32_0 : i32, i32
  }
  func.func @transform_4(%arg0: i32) -> (i32, i32) {
    %c0_i32 = arith.constant 0 : i32
    %c0_i32_0 = arith.constant 0 : i32
    %c0_i32_1 = arith.constant 0 : i32
    return %c0_i32, %c0_i32_0 : i32, i32
  }
  func.func @transform_5(%arg0: i32) -> (i32, i32) {
    %c0_i32 = arith.constant 0 : i32
    %c0_i32_0 = arith.constant 0 : i32
    %c0_i32_1 = arith.constant 0 : i32
    return %c0_i32, %c0_i32_0 : i32, i32
  }
  func.func @transform_6(%arg0: i32) -> (i32, i32) {
    %c0_i32 = arith.constant 0 : i32
    %c0_i32_0 = arith.constant 0 : i32
    %c0_i32_1 = arith.constant 0 : i32
    return %c0_i32, %c0_i32_0 : i32, i32
  }
  func.func @transform_7(%arg0: i32) -> (i32, i32) {
    %c0_i32 = arith.constant 0 : i32
    %c0_i32_0 = arith.constant 0 : i32
    return %arg0, %c0_i32 : i32, i32
  }
}

</mosaic_0001>

<llo_original>
// kernel: dqn_forward.1
$region0: #{dqn_forward.1}
  #allocation0 [shape = 'u32[]', space=smem, size = 0x4, offset = 0x4, fixed_abs, tag = 'smem constant byte address 0x4 - core index']
  #allocation1 [shape = 'u32[72,128]{1,0:T(1,128)}', space=vmem, size = 0x9000, scoped, tag = 'internal scratch']
  %s0 = inlined_call_operand.vmem [shape: f32[8,4], index: 0, kind: input, shape index: {}]
  %s1 = inlined_call_operand.vmem [shape: f32[4,16], index: 1, kind: input, shape index: {}]
  %s2 = inlined_call_operand.vmem [shape: f32[1,16], index: 2, kind: input, shape index: {}]
  %s3 = inlined_call_operand.vmem [shape: f32[16,8], index: 3, kind: input, shape index: {}]
  %s4 = inlined_call_operand.vmem [shape: f32[1,8], index: 4, kind: input, shape index: {}]
  %s5 = inlined_call_operand.vmem [shape: f32[8,2], index: 5, kind: input, shape index: {}]
  %s6 = inlined_call_operand.vmem [shape: f32[1,2], index: 6, kind: input, shape index: {}]
  %s7 = inlined_call_operand.vmem [shape: f32[8,2], index: 7, kind: output, shape index: {}]
  %s8 = sld [smem:[#allocation0]]
  $region38: #{dqn_forward.1} parent=0
    _
  %s10 = ssub.s32 1, %s8
  %s11 = scalar_select 0, %s10, %s8
  // Predicated region
  $region2: #{dqn_forward.1} parent=0 // pred_check
    _
  $region3: #{dqn_forward.1} parent=0 // pred_check_branch
    %13 = sbr.rel (0) target = $region5
  $region4: #{dqn_forward.1} parent=0 // pred_region
    _
  $region5: #{dqn_forward.1} parent=0 // pred_fallthru
    _
  // Predicated region
  $region6: #{dqn_forward.1} parent=0 // pred_check
    _
  $region7: #{dqn_forward.1} parent=0 // pred_check_branch
    %15 = sbr.rel (0) target = $region9
  $region8: #{dqn_forward.1} parent=0 // pred_region
    _
  $region9: #{dqn_forward.1} parent=0 // pred_fallthru
    _
  // Predicated region
  $region10: #{dqn_forward.1} parent=0 // pred_check
    _
  $region11: #{dqn_forward.1} parent=0 // pred_check_branch
    %17 = sbr.rel (0) target = $region13
  $region12: #{dqn_forward.1} parent=0 // pred_region
    _
  $region13: #{dqn_forward.1} parent=0 // pred_fallthru
    _
  // Predicated region
  $region14: #{dqn_forward.1} parent=0 // pred_check
    _
  $region15: #{dqn_forward.1} parent=0 // pred_check_branch
    %19 = sbr.rel (0) target = $region17
  $region16: #{dqn_forward.1} parent=0 // pred_region
    _
  $region17: #{dqn_forward.1} parent=0 // pred_fallthru
    _
  // Predicated region
  $region18: #{dqn_forward.1} parent=0 // pred_check
    _
  $region19: #{dqn_forward.1} parent=0 // pred_check_branch
    %21 = sbr.rel (0) target = $region21
  $region20: #{dqn_forward.1} parent=0 // pred_region
    _
  $region21: #{dqn_forward.1} parent=0 // pred_fallthru
    _
  // Predicated region
  $region22: #{dqn_forward.1} parent=0 // pred_check
    _
  $region23: #{dqn_forward.1} parent=0 // pred_check_branch
    %23 = sbr.rel (0) target = $region25
  $region24: #{dqn_forward.1} parent=0 // pred_region
    _
  $region25: #{dqn_forward.1} parent=0 // pred_fallthru
    _
  // Predicated region
  $region26: #{dqn_forward.1} parent=0 // pred_check
    _
  $region27: #{dqn_forward.1} parent=0 // pred_check_branch
    %25 = sbr.rel (0) target = $region29
  $region28: #{dqn_forward.1} parent=0 // pred_region
    _
  $region29: #{dqn_forward.1} parent=0 // pred_fallthru
    _
  %v26 = vld [vmem:[%s0] sm:$0xff]
  %v27 = vld [vmem:[%s1] sm:$0xf]
  %v28 = vld [vmem:[%s2] sm:$0x1]
  %30 = vset.pattern.permute.xlu0 0
  %31 = vperm.xlu0 %30, %v26
  %v32 = vpop.permute.xlu0 %31
  %v34 = vperm.slane %v27, 0
  %v35 = vmul.f32 %v32, %v34
  %v37 = vperm.slane %v28, 0
  %v39 = vadd.f32 %v37, %v35
  %40 = vset.pattern.permute.xlu0 1
  %41 = vperm.xlu0 %40, %v26
  %v42 = vpop.permute.xlu0 %41
  %v44 = vperm.slane %v27, 1
  %v45 = vmul.f32 %v42, %v44
  %v46 = vadd.f32 %v39, %v45
  %47 = vset.pattern.permute.xlu0 2
  %48 = vperm.xlu0 %47, %v26
  %v49 = vpop.permute.xlu0 %48
  %v51 = vperm.slane %v27, 2
  %v52 = vmul.f32 %v49, %v51
  %v53 = vadd.f32 %v46, %v52
  %54 = vset.pattern.permute.xlu0 3
  %55 = vperm.xlu0 %54, %v26
  %v56 = vpop.permute.xlu0 %55
  %v58 = vperm.slane %v27, 3
  %v59 = vmul.f32 %v56, %v58
  %v60 = vadd.f32 %v53, %v59
  %v61 = vmax.f32 %v60, 0.0
  %v62 = vld [vmem:[%s3] sm:$0xff]
  %v63 = vld [vmem:[%s3 + $0x8] sm:$0xff]
  %v64 = vld [vmem:[%s4] sm:$0x1]
  %66 = vset.pattern.permute.xlu0 0
  %67 = vperm.xlu0 %66, %v61
  %v68 = vpop.permute.xlu0 %67
  %v70 = vperm.slane %v62, 0
  %v71 = vmul.f32 %v68, %v70
  %v73 = vperm.slane %v64, 0
  %v75 = vadd.f32 %v73, %v71
  %76 = vset.pattern.permute.xlu0 1
  %77 = vperm.xlu0 %76, %v61
  %v78 = vpop.permute.xlu0 %77
  %v80 = vperm.slane %v62, 1
  %v81 = vmul.f32 %v78, %v80
  %v82 = vadd.f32 %v75, %v81
  %83 = vset.pattern.permute.xlu0 2
  %84 = vperm.xlu0 %83, %v61
  %v85 = vpop.permute.xlu0 %84
  %v87 = vperm.slane %v62, 2
  %v88 = vmul.f32 %v85, %v87
  %v89 = vadd.f32 %v82, %v88
  %90 = vset.pattern.permute.xlu0 3
  %91 = vperm.xlu0 %90, %v61
  %v92 = vpop.permute.xlu0 %91
  %v94 = vperm.slane %v62, 3
  %v95 = vmul.f32 %v92, %v94
  %v96 = vadd.f32 %v89, %v95
  %97 = vset.pattern.permute.xlu0 4
  %98 = vperm.xlu0 %97, %v61
  %v99 = vpop.permute.xlu0 %98
  %v101 = vperm.slane %v62, 4
  %v102 = vmul.f32 %v99, %v101
  %v103 = vadd.f32 %v96, %v102
  %104 = vset.pattern.permute.xlu0 5
  %105 = vperm.xlu0 %104, %v61
  %v106 = vpop.permute.xlu0 %105
  %v108 = vperm.slane %v62, 5
  %v109 = vmul.f32 %v106, %v108
  %v110 = vadd.f32 %v103, %v109
  %111 = vset.pattern.permute.xlu0 6
  %112 = vperm.xlu0 %111, %v61
  %v113 = vpop.permute.xlu0 %112
  %v115 = vperm.slane %v62, 6
  %v116 = vmul.f32 %v113, %v115
  %v117 = vadd.f32 %v110, %v116
  %118 = vset.pattern.permute.xlu0 7
  %119 = vperm.xlu0 %118, %v61
  %v120 = vpop.permute.xlu0 %119
  %v122 = vperm.slane %v62, 7
  %v123 = vmul.f32 %v120, %v122
  %v124 = vadd.f32 %v117, %v123
  %125 = vset.pattern.permute.xlu0 8
  %126 = vperm.xlu0 %125, %v61
  %v127 = vpop.permute.xlu0 %126
  %v129 = vperm.slane %v63, 0
  %v130 = vmul.f32 %v127, %v129
  %v131 = vadd.f32 %v124, %v130
  %132 = vset.pattern.permute.xlu0 9
  %133 = vperm.xlu0 %132, %v61
  %v134 = vpop.permute.xlu0 %133
  %v136 = vperm.slane %v63, 1
  %v137 = vmul.f32 %v134, %v136
  %v138 = vadd.f32 %v131, %v137
  %139 = vset.pattern.permute.xlu0 10
  %140 = vperm.xlu0 %139, %v61
  %v141 = vpop.permute.xlu0 %140
  %v143 = vperm.slane %v63, 2
  %v144 = vmul.f32 %v141, %v143
  %v145 = vadd.f32 %v138, %v144
  %146 = vset.pattern.permute.xlu0 11
  %147 = vperm.xlu0 %146, %v61
  %v148 = vpop.permute.xlu0 %147
  %v150 = vperm.slane %v63, 3
  %v151 = vmul.f32 %v148, %v150
  %v152 = vadd.f32 %v145, %v151
  %153 = vset.pattern.permute.xlu0 12
  %154 = vperm.xlu0 %153, %v61
  %v155 = vpop.permute.xlu0 %154
  %v157 = vperm.slane %v63, 4
  %v158 = vmul.f32 %v155, %v157
  %v159 = vadd.f32 %v152, %v158
  %160 = vset.pattern.permute.xlu0 13
  %161 = vperm.xlu0 %160, %v61
  %v162 = vpop.permute.xlu0 %161
  %v164 = vperm.slane %v63, 5
  %v165 = vmul.f32 %v162, %v164
  %v166 = vadd.f32 %v159, %v165
  %167 = vset.pattern.permute.xlu0 14
  %168 = vperm.xlu0 %167, %v61
  %v169 = vpop.permute.xlu0 %168
  %v171 = vperm.slane %v63, 6
  %v172 = vmul.f32 %v169, %v171
  %v173 = vadd.f32 %v166, %v172
  %174 = vset.pattern.permute.xlu0 15
  %175 = vperm.xlu0 %174, %v61
  %v176 = vpop.permute.xlu0 %175
  %v178 = vperm.slane %v63, 7
  %v179 = vmul.f32 %v176, %v178
  %v180 = vadd.f32 %v173, %v179
  %v181 = vmax.f32 %v180, 0.0
  %v182 = vld [vmem:[%s5] sm:$0xff]
  %v183 = vld [vmem:[%s6] sm:$0x1]
  %185 = vset.pattern.permute.xlu0 0
  %186 = vperm.xlu0 %185, %v181
  %v187 = vpop.permute.xlu0 %186
  %v189 = vperm.slane %v182, 0
  %v190 = vmul.f32 %v187, %v189
  %v192 = vperm.slane %v183, 0
  %v194 = vadd.f32 %v192, %v190
  %195 = vset.pattern.permute.xlu0 1
  %196 = vperm.xlu0 %195, %v181
  %v197 = vpop.permute.xlu0 %196
  %v199 = vperm.slane %v182, 1
  %v200 = vmul.f32 %v197, %v199
  %v201 = vadd.f32 %v194, %v200
  %202 = vset.pattern.permute.xlu0 2
  %203 = vperm.xlu0 %202, %v181
  %v204 = vpop.permute.xlu0 %203
  %v206 = vperm.slane %v182, 2
  %v207 = vmul.f32 %v204, %v206
  %v208 = vadd.f32 %v201, %v207
  %209 = vset.pattern.permute.xlu0 3
  %210 = vperm.xlu0 %209, %v181
  %v211 = vpop.permute.xlu0 %210
  %v213 = vperm.slane %v182, 3
  %v214 = vmul.f32 %v211, %v213
  %v215 = vadd.f32 %v208, %v214
  %216 = vset.pattern.permute.xlu0 4
  %217 = vperm.xlu0 %216, %v181
  %v218 = vpop.permute.xlu0 %217
  %v220 = vperm.slane %v182, 4
  %v221 = vmul.f32 %v218, %v220
  %v222 = vadd.f32 %v215, %v221
  %223 = vset.pattern.permute.xlu0 5
  %224 = vperm.xlu0 %223, %v181
  %v225 = vpop.permute.xlu0 %224
  %v227 = vperm.slane %v182, 5
  %v228 = vmul.f32 %v225, %v227
  %v229 = vadd.f32 %v222, %v228
  %230 = vset.pattern.permute.xlu0 6
  %231 = vperm.xlu0 %230, %v181
  %v232 = vpop.permute.xlu0 %231
  %v234 = vperm.slane %v182, 6
  %v235 = vmul.f32 %v232, %v234
  %v236 = vadd.f32 %v229, %v235
  %237 = vset.pattern.permute.xlu0 7
  %238 = vperm.xlu0 %237, %v181
  %v239 = vpop.permute.xlu0 %238
  %v241 = vperm.slane %v182, 7
  %v242 = vmul.f32 %v239, %v241
  %v243 = vadd.f32 %v236, %v242
  %vm244 = vcmask 15360
  %245 = vst.msk [vmem:[%s7] sm:$0xff] %vm244, %v243
  // Predicated region
  $region30: #{dqn_forward.1} parent=0 // pred_check
    _
  $region31: #{dqn_forward.1} parent=0 // pred_check_branch
    %247 = sbr.rel (0) target = $region33
  $region32: #{dqn_forward.1} parent=0 // pred_region
    _
  $region33: #{dqn_forward.1} parent=0 // pred_fallthru
    _
  // Predicated region
  $region34: #{dqn_forward.1} parent=0 // pred_check
    _
  $region35: #{dqn_forward.1} parent=0 // pred_check_branch
    %249 = sbr.rel (0) target = $region37
  $region36: #{dqn_forward.1} parent=0 // pred_region
    _
  $region37: #{dqn_forward.1} parent=0 // pred_fallthru
    _

</llo_original>
